<compile_context>
chip_gen: v7x
topology: tpu7x:2x2x1
jax: 0.10.0
libtpu: 0.0.40
codegen_flags: <defaults>
</compile_context>

<pallas_src>
import functools

import jax
import jax.numpy as jnp
from jax.experimental import pallas as pl
from jax.experimental.pallas import tpu as pltpu

_LANE = 128      # vreg lane width
_SUBLANE = 8     # vreg sublane count


def _round_up(x, m):
    return ((x + m - 1) // m) * m


def _chip_params():
    """(row-tile cap, vmem_limit_bytes) tuned per TPU generation."""
    kind = ""
    try:
        dev = jax.devices()[0]
        if dev.platform == "tpu":
            kind = dev.device_kind.lower()
    except Exception:
        pass
    if "v5" in kind or "v6" in kind:
        # 128 MiB physical VMEM, lowest HBM BW -> big tiles, generous limit.
        return 512, 96 * 1024 * 1024
    # v7x: 64 MiB per-TC VMEM (each TC keeps its own resident weights);
    # unknown chips get the same conservative budget.
    return 256, 48 * 1024 * 1024


def _vmem_estimate(tm, d_in, d_in_pad, d_out_pad, x_isz, o_isz):
    """Conservative VMEM bytes: 2x-buffered weights + tiles, plus scratch."""
    weights = (d_in_pad * d_in_pad + d_in_pad * d_out_pad) * 2 \
              + (d_in_pad + d_out_pad) * 4
    tiles = tm * d_in * x_isz + tm * d_out_pad * o_isz
    scratch = tm * d_in_pad * 2 if (d_in % _LANE) else 0
    return 2 * weights + 2 * tiles + scratch


def _pad2d(a, shape, dtype):
    a = a.astype(dtype)
    if a.shape == tuple(shape):
        return a
    return jnp.zeros(shape, dtype).at[:a.shape[0], :a.shape[1]].set(a)


def _prediction_head_kernel(x_ref, w1_ref, b1_ref, w2_ref, b2_ref, o_ref,
                            *scratch, d_in):
    # x_ref:  (TM, d_in)            x.dtype  row tile (pipelined over the grid)
    # w1_ref: (d_in_pad, d_in_pad)  bf16     dense.weight^T   (VMEM-resident)
    # b1_ref: (1, d_in_pad)         f32
    # w2_ref: (d_in_pad, d_out_pad) bf16     linear.weight^T  (VMEM-resident)
    # b2_ref: (1, d_out_pad)        f32
    # o_ref:  (TM, d_out_pad)       x.dtype
    # scratch (only when d_in % 128 != 0): (TM, d_in_pad) bf16 staging buffer.
    x = x_ref[...].astype(jnp.bfloat16)          # in-kernel cast: no wrapper pass
    if scratch:
        xs_ref = scratch[0]
        xs_ref[...] = jnp.zeros_like(xs_ref)     # zero the padded K lanes
        xs_ref[:, :d_in] = x
        x = xs_ref[...]

    # dense: bf16 x bf16 -> f32 accumulation on the MXU.
    h = jnp.dot(x, w1_ref[...], preferred_element_type=jnp.float32)
    # bias + tanh in f32 (VPU + EUP; EUP has its own bundle slot).
    h = jnp.tanh(h + b1_ref[...])

    # linear: second MXU matmul with dense K (= d_in_pad).
    out = jnp.dot(h.astype(w2_ref.dtype), w2_ref[...],
                  preferred_element_type=jnp.float32)
    o_ref[...] = (out + b2_ref[...]).astype(o_ref.dtype)


@jax.jit
def prediction_head_forward(x, w1, b1, w2, b2):
    """x: (..., D_in). w1: (D_in, D_in), b1: (D_in,), w2: (D_in, D_out), b2: (D_out,).

    Returns (..., D_out) in x.dtype. Equivalent to eval-mode PredictionHead.
    """
    lead_shape = x.shape[:-1]
    d_in = x.shape[-1]
    d_out = w2.shape[-1]
    x2d = x.reshape(-1, d_in)
    m = x2d.shape[0]

    tm_max, vmem_limit = _chip_params()

    d_in_pad = _round_up(d_in, _LANE)
    d_out_lane = _round_up(d_out, _LANE)
    # Lane-dense output only when padding costs <= 2x writeback amplification;
    # tiny heads (e.g. num_labels=4) write exact width instead (masked stores).
    d_out_pad = d_out_lane if d_out_lane <= 2 * d_out else d_out

    x_isz = jnp.dtype(x.dtype).itemsize
    o_isz = x_isz

    # Balanced row tiles: tail waste < 8 rows, and >= 2 grid steps (both v7x
    # TensorCores busy) whenever m spans more than one tile.
    n_tiles = pl.cdiv(m, tm_max)
    tm = _round_up(pl.cdiv(m, n_tiles), _SUBLANE)

    # Shrink tm if resident weights + pipelined tiles would blow the budget.
    budget = int(0.8 * vmem_limit)
    while tm > _SUBLANE and _vmem_estimate(
            tm, d_in, d_in_pad, d_out_pad, x_isz, o_isz) > budget:
        tm = max(_SUBLANE, _round_up(tm // 2, _SUBLANE))

    if _vmem_estimate(_SUBLANE, d_in, d_in_pad, d_out_pad,
                      x_isz, o_isz) > budget:
        # Resident weights alone don't fit (very large hidden size).
        # TODO(synk): add a K-tiled grid axis (f32 accumulator scratch,
        # "arbitrary" semantics) instead of this plain-XLA fallback.
        out2d = (jnp.tanh(x2d @ w1 + b1) @ w2 + b2).astype(x.dtype)
        return out2d.reshape(*lead_shape, d_out)

    grid = (int(pl.cdiv(m, tm)),)

    # One-time weight/bias prep: bf16 weights, zero-padded contraction dims.
    w1_p = _pad2d(w1, (d_in_pad, d_in_pad), jnp.bfloat16)
    w2_p = _pad2d(w2, (d_in_pad, d_out_pad), jnp.bfloat16)
    b1_p = _pad2d(b1.reshape(1, d_in), (1, d_in_pad), jnp.float32)
    b2_p = _pad2d(b2.reshape(1, d_out), (1, d_out_pad), jnp.float32)

    scratch_shapes = []
    if d_in % _LANE != 0:
        scratch_shapes.append(pltpu.VMEM((tm, d_in_pad), jnp.bfloat16))

    cost = pl.CostEstimate(
        flops=int(2 * m * d_in_pad * (d_in_pad + d_out_pad)),
        transcendentals=int(m * d_in_pad),
        bytes_accessed=int(m * d_in * x_isz
                           + (d_in_pad * d_in_pad + d_in_pad * d_out_pad) * 2
                           + (d_in_pad + d_out_pad) * 4
                           + m * d_out_pad * o_isz),
    )

    kernel = functools.partial(_prediction_head_kernel, d_in=d_in)

    out2d = pl.pallas_call(
        kernel,
        out_shape=jax.ShapeDtypeStruct((m, d_out_pad), x.dtype),
        grid_spec=pltpu.PrefetchScalarGridSpec(
            num_scalar_prefetch=0,
            grid=grid,
            in_specs=[
                pl.BlockSpec((tm, d_in), lambda i: (i, 0)),             # x tile
                pl.BlockSpec((d_in_pad, d_in_pad), lambda i: (0, 0)),   # w1 (resident)
                pl.BlockSpec((1, d_in_pad), lambda i: (0, 0)),          # b1
                pl.BlockSpec((d_in_pad, d_out_pad), lambda i: (0, 0)),  # w2 (resident)
                pl.BlockSpec((1, d_out_pad), lambda i: (0, 0)),         # b2
            ],
            out_specs=pl.BlockSpec((tm, d_out_pad), lambda i: (i, 0)),
            scratch_shapes=scratch_shapes,
        ),
        compiler_params=pltpu.CompilerParams(
            # Row tiles are independent -> shard across v7x's 2 TensorCores.
            dimension_semantics=("parallel",),
            vmem_limit_bytes=int(vmem_limit),
        ),
        cost_estimate=cost,
    )(x2d, w1_p, b1_p, w2_p, b2_p)

    if d_out_pad != d_out:
        out2d = out2d[:, :d_out]
    return out2d.reshape(*lead_shape, d_out)


def _init_params(key, d_in, d_out):
    """Deterministic init mimicking nn.Linear (uniform(-1/sqrt(fan_in), ...))."""
    k1, k2, k3, k4 = jax.random.split(key, 4)
    bound = 1.0 / jnp.sqrt(jnp.float32(d_in))
    # Stored already transposed: (in_features, out_features).
    w1 = jax.random.uniform(k1, (d_in, d_in), jnp.float32, -bound, bound)
    b1 = jax.random.uniform(k2, (d_in,), jnp.float32, -bound, bound)
    w2 = jax.random.uniform(k3, (d_in, d_out), jnp.float32, -bound, bound)
    b2 = jax.random.uniform(k4, (d_out,), jnp.float32, -bound, bound)
    return w1, b1, w2, b2


if __name__ == "__main__":
    # config.hidden_size = 32, config.num_labels = 4, dropout -> identity (eval)
    batch, seq, hidden, num_labels = 2, 8, 32, 4

    key = jax.random.PRNGKey(0)
    kx, kp = jax.random.split(key)
    x = jax.random.normal(kx, (batch, seq, hidden), jnp.float32)
    w1, b1, w2, b2 = _init_params(kp, hidden, num_labels)

    out = prediction_head_forward(x, w1, b1, w2, b2)
    out = jax.block_until_ready(out)

    # Reference in plain f32 JAX (dropout is identity at inference). bf16
    # matmul operands with f32 accumulation give ~1e-2-level deviation.
    ref = jnp.tanh(x @ w1 + b1) @ w2 + b2
    assert out.shape == (batch, seq, num_labels)
    assert out.dtype == x.dtype
    assert jnp.allclose(out, ref, atol=5e-2, rtol=5e-2), float(
        jnp.max(jnp.abs(out - ref)))

    print("KERNEL_OK")
</pallas_src>

<mosaic_0001>
module attributes {stable_mosaic.version = 11 : i64} {
  func.func @_prediction_head_kernel(%arg0: i32, %arg1: memref<16x32xf32, #tpu.memory_space<vmem>>, %arg2: memref<128x128xbf16, #tpu.memory_space<vmem>>, %arg3: memref<1x128xf32, #tpu.memory_space<vmem>>, %arg4: memref<128x4xbf16, #tpu.memory_space<vmem>>, %arg5: memref<1x4xf32, #tpu.memory_space<vmem>>, %arg6: memref<16x4xf32, #tpu.memory_space<vmem>>, %arg7: memref<16x128xbf16, #tpu.memory_space<vmem>>) attributes {dimension_semantics = [#tpu.dimension_semantics<parallel>], iteration_bounds = array<i64: 1>, scalar_prefetch = 0 : i64, scratch_operands = 1 : i64, tpu.core_type = #tpu.core_type<tc>, window_params = [{transform_indices = @transform_0, window_bounds = array<i64: 16, 32>}, {pipeline_mode = #tpu.pipeline_mode<synchronous>, transform_indices = @transform_1, window_bounds = array<i64: 128, 128>}, {pipeline_mode = #tpu.pipeline_mode<synchronous>, transform_indices = @transform_2, window_bounds = array<i64: 1, 128>}, {pipeline_mode = #tpu.pipeline_mode<synchronous>, transform_indices = @transform_3, window_bounds = array<i64: 128, 4>}, {pipeline_mode = #tpu.pipeline_mode<synchronous>, transform_indices = @transform_4, window_bounds = array<i64: 1, 4>}, {transform_indices = @transform_5, window_bounds = array<i64: 16, 4>}]} {
    %c0 = arith.constant 0 : index
    %c0_0 = arith.constant 0 : index
    %0 = vector.load %arg1[%c0, %c0_0] : memref<16x32xf32, #tpu.memory_space<vmem>>, vector<16x32xf32>
    %1 = arith.truncf %0 : vector<16x32xf32> to vector<16x32xbf16>
    %cst = arith.constant 0.000000e+00 : bf16
    %2 = vector.broadcast %cst : bf16 to vector<16x128xbf16>
    %c0_1 = arith.constant 0 : index
    %c0_2 = arith.constant 0 : index
    %3 = vector.load %arg7[%c0_1, %c0_2] : memref<16x128xbf16, #tpu.memory_space<vmem>>, vector<16x128xbf16>
    tpu.vector_store %arg7[%c0_1, %c0_2], %2 {strides = array<i32>} : memref<16x128xbf16, #tpu.memory_space<vmem>>, vector<16x128xbf16>,
    %c0_3 = arith.constant 0 : index
    %c0_4 = arith.constant 0 : index
    %4 = vector.load %arg7[%c0_3, %c0_4] : memref<16x128xbf16, #tpu.memory_space<vmem>>, vector<16x32xbf16>
    tpu.vector_store %arg7[%c0_3, %c0_4], %1 {strides = array<i32>} : memref<16x128xbf16, #tpu.memory_space<vmem>>, vector<16x32xbf16>,
    %c0_5 = arith.constant 0 : index
    %c0_6 = arith.constant 0 : index
    %5 = vector.load %arg7[%c0_5, %c0_6] : memref<16x128xbf16, #tpu.memory_space<vmem>>, vector<16x128xbf16>
    %c0_7 = arith.constant 0 : index
    %c0_8 = arith.constant 0 : index
    %6 = vector.load %arg2[%c0_7, %c0_8] : memref<128x128xbf16, #tpu.memory_space<vmem>>, vector<128x128xbf16>
    %cst_9 = arith.constant dense<0.000000e+00> : vector<16x128xf32>
    %7 = tpu.matmul %5, %6, %cst_9 {dimension_numbers = #tpu.dot_dimension_numbers<[1], [0], [0], [1], [0, 0, 1, 1], [], []>} : vector<16x128xbf16>, vector<128x128xbf16>, vector<16x128xf32> -> vector<16x128xf32>
    %c0_10 = arith.constant 0 : index
    %c0_11 = arith.constant 0 : index
    %8 = vector.load %arg3[%c0_10, %c0_11] : memref<1x128xf32, #tpu.memory_space<vmem>>, vector<1x128xf32>
    %9 = vector.broadcast %8 : vector<1x128xf32> to vector<16x128xf32>
    %10 = arith.addf %7, %9 : vector<16x128xf32>
    %11 = math.tanh %10 : vector<16x128xf32>
    %12 = arith.truncf %11 : vector<16x128xf32> to vector<16x128xbf16>
    %c0_12 = arith.constant 0 : index
    %c0_13 = arith.constant 0 : index
    %13 = vector.load %arg4[%c0_12, %c0_13] : memref<128x4xbf16, #tpu.memory_space<vmem>>, vector<128x4xbf16>
    %cst_14 = arith.constant dense<0.000000e+00> : vector<16x4xf32>
    %14 = tpu.matmul %12, %13, %cst_14 {dimension_numbers = #tpu.dot_dimension_numbers<[1], [0], [0], [1], [0, 0, 1, 1], [], []>} : vector<16x128xbf16>, vector<128x4xbf16>, vector<16x4xf32> -> vector<16x4xf32>
    %c0_15 = arith.constant 0 : index
    %c0_16 = arith.constant 0 : index
    %15 = vector.load %arg5[%c0_15, %c0_16] : memref<1x4xf32, #tpu.memory_space<vmem>>, vector<1x4xf32>
    %16 = vector.broadcast %15 : vector<1x4xf32> to vector<16x4xf32>
    %17 = arith.addf %14, %16 : vector<16x4xf32>
    %c0_17 = arith.constant 0 : index
    %c0_18 = arith.constant 0 : index
    %18 = vector.load %arg6[%c0_17, %c0_18] : memref<16x4xf32, #tpu.memory_space<vmem>>, vector<16x4xf32>
    tpu.vector_store %arg6[%c0_17, %c0_18], %17 {strides = array<i32>} : memref<16x4xf32, #tpu.memory_space<vmem>>, vector<16x4xf32>,
    return
  }
  func.func @transform_0(%arg0: i32) -> (i32, i32) {
    %c0_i32 = arith.constant 0 : i32
    %c0_i32_0 = arith.constant 0 : i32
    return %arg0, %c0_i32 : i32, i32
  }
  func.func @transform_1(%arg0: i32) -> (i32, i32) {
    %c0_i32 = arith.constant 0 : i32
    %c0_i32_0 = arith.constant 0 : i32
    %c0_i32_1 = arith.constant 0 : i32
    return %c0_i32, %c0_i32_0 : i32, i32
  }
  func.func @transform_2(%arg0: i32) -> (i32, i32) {
    %c0_i32 = arith.constant 0 : i32
    %c0_i32_0 = arith.constant 0 : i32
    %c0_i32_1 = arith.constant 0 : i32
    return %c0_i32, %c0_i32_0 : i32, i32
  }
  func.func @transform_3(%arg0: i32) -> (i32, i32) {
    %c0_i32 = arith.constant 0 : i32
    %c0_i32_0 = arith.constant 0 : i32
    %c0_i32_1 = arith.constant 0 : i32
    return %c0_i32, %c0_i32_0 : i32, i32
  }
  func.func @transform_4(%arg0: i32) -> (i32, i32) {
    %c0_i32 = arith.constant 0 : i32
    %c0_i32_0 = arith.constant 0 : i32
    %c0_i32_1 = arith.constant 0 : i32
    return %c0_i32, %c0_i32_0 : i32, i32
  }
  func.func @transform_5(%arg0: i32) -> (i32, i32) {
    %c0_i32 = arith.constant 0 : i32
    %c0_i32_0 = arith.constant 0 : i32
    return %arg0, %c0_i32 : i32, i32
  }
}

</mosaic_0001>

<llo_original>
// kernel: prediction_head_forward.1
$region0: #{prediction_head_forward.1}
  #allocation0 [shape = 'u32[]', space=smem, size = 0x4, offset = 0x4, fixed_abs, tag = 'smem constant byte address 0x4 - core index']
  #allocation1 [shape = 'u32[144,128]{1,0:T(1,128)}', space=vmem, size = 0x12000, scoped, tag = 'internal scratch']
  #allocation2 [shape = 'bf16[16,128]{1,0:T(16,128)(2,1)}', space=vmem, size = 0x1000, scoped, tag = 'scratch operand']
  %s0 = inlined_call_operand.vmem [shape: f32[16,32], index: 0, kind: input, shape index: {}]
  %s1 = inlined_call_operand.vmem [shape: bf16[128,128], index: 1, kind: input, shape index: {}]
  %s2 = inlined_call_operand.vmem [shape: f32[1,128], index: 2, kind: input, shape index: {}]
  %s3 = inlined_call_operand.vmem [shape: bf16[128,4], index: 3, kind: input, shape index: {}]
  %s4 = inlined_call_operand.vmem [shape: f32[1,4], index: 4, kind: input, shape index: {}]
  %s5 = inlined_call_operand.vmem [shape: f32[16,4], index: 5, kind: output, shape index: {}]
  %s6 = sld [smem:[#allocation0]]
  $region30: #{prediction_head_forward.1} parent=0
    _
  %s8 = ssub.s32 1, %s6
  %s9 = scalar_select 0, %s8, %s6
  // Predicated region
  $region2: #{prediction_head_forward.1} parent=0 // pred_check
    _
  $region3: #{prediction_head_forward.1} parent=0 // pred_check_branch
    %11 = sbr.rel (0) target = $region5
  $region4: #{prediction_head_forward.1} parent=0 // pred_region
    _
  $region5: #{prediction_head_forward.1} parent=0 // pred_fallthru
    _
  // Predicated region
  $region6: #{prediction_head_forward.1} parent=0 // pred_check
    _
  $region7: #{prediction_head_forward.1} parent=0 // pred_check_branch
    %13 = sbr.rel (0) target = $region9
  $region8: #{prediction_head_forward.1} parent=0 // pred_region
    _
  $region9: #{prediction_head_forward.1} parent=0 // pred_fallthru
    _
  // Predicated region
  $region10: #{prediction_head_forward.1} parent=0 // pred_check
    _
  $region11: #{prediction_head_forward.1} parent=0 // pred_check_branch
    %15 = sbr.rel (0) target = $region13
  $region12: #{prediction_head_forward.1} parent=0 // pred_region
    _
  $region13: #{prediction_head_forward.1} parent=0 // pred_fallthru
    _
  // Predicated region
  $region14: #{prediction_head_forward.1} parent=0 // pred_check
    _
  $region15: #{prediction_head_forward.1} parent=0 // pred_check_branch
    %17 = sbr.rel (0) target = $region17
  $region16: #{prediction_head_forward.1} parent=0 // pred_region
    _
  $region17: #{prediction_head_forward.1} parent=0 // pred_fallthru
    _
  // Predicated region
  $region18: #{prediction_head_forward.1} parent=0 // pred_check
    _
  $region19: #{prediction_head_forward.1} parent=0 // pred_check_branch
    %19 = sbr.rel (0) target = $region21
  $region20: #{prediction_head_forward.1} parent=0 // pred_region
    _
  $region21: #{prediction_head_forward.1} parent=0 // pred_fallthru
    _
  %v21 = vld [vmem:[%s0] sm:$0xff]
  %v22 = vld [vmem:[%s0 + $0x8] sm:$0xff]
  %v23 = vpack.c.bf16 %v22, %v21
  %24 = vst [vmem:[#allocation2] sm:$0xff] 0
  %vm25 = vcmask 261120
  %26 = vst.msk [vmem:[#allocation2] sm:$0xff] %vm25, %v23
  %v27 = vld [vmem:[#allocation2] sm:$0xff]
  %v28 = vld [vmem:[%s1] sm:$0xf]
  %v29 = vld [vmem:[%s1 + $0x4] sm:$0xf]
  %v30 = vld [vmem:[%s1 + $0x8] sm:$0xf]
  %v31 = vld [vmem:[%s1 + $0xc] sm:$0xf]
  %v32 = vld [vmem:[%s1 + $0x10] sm:$0xf]
  %v33 = vld [vmem:[%s1 + $0x14] sm:$0xf]
  %v34 = vld [vmem:[%s1 + $0x18] sm:$0xf]
  %v35 = vld [vmem:[%s1 + $0x1c] sm:$0xf]
  %v36 = vld [vmem:[%s1 + $0x20] sm:$0xf]
  %v37 = vld [vmem:[%s1 + $0x24] sm:$0xf]
  %v38 = vld [vmem:[%s1 + $0x28] sm:$0xf]
  %v39 = vld [vmem:[%s1 + $0x2c] sm:$0xf]
  %v40 = vld [vmem:[%s1 + $0x30] sm:$0xf]
  %v41 = vld [vmem:[%s1 + $0x34] sm:$0xf]
  %v42 = vld [vmem:[%s1 + $0x38] sm:$0xf]
  %v43 = vld [vmem:[%s1 + $0x3c] sm:$0xf]
  %v44 = vld [vmem:[%s2] sm:$0x1]
  %v46 = vlaneseq
  %v47 = vshrl.u32 %v46, 7
  %v48 = vsub.s32 0, %v47
  %v49 = vrot.slane %v44, %v48
  %v67 = vunpack.c.l.b16 %v28
  %v68 = vunpack.c.l.b16 %v29
  %v69 = vunpack.c.l.b16 %v30
  %v70 = vunpack.c.l.b16 %v31
  %v71 = vunpack.c.l.b16 %v32
  %v72 = vunpack.c.l.b16 %v33
  %v73 = vunpack.c.l.b16 %v34
  %v74 = vunpack.c.l.b16 %v35
  %v75 = vunpack.c.l.b16 %v36
  %v76 = vunpack.c.l.b16 %v37
  %v77 = vunpack.c.l.b16 %v38
  %v78 = vunpack.c.l.b16 %v39
  %v79 = vunpack.c.l.b16 %v40
  %v80 = vunpack.c.l.b16 %v41
  %v81 = vunpack.c.l.b16 %v42
  %v82 = vunpack.c.l.b16 %v43
  %v83 = vpack.c.b16 %v68, %v67
  %v84 = vpack.c.b16 %v70, %v69
  %v85 = vpack.c.b16 %v72, %v71
  %v86 = vpack.c.b16 %v74, %v73
  %v87 = vpack.c.b16 %v76, %v75
  %v88 = vpack.c.b16 %v78, %v77
  %v89 = vpack.c.b16 %v80, %v79
  %v90 = vpack.c.b16 %v82, %v81
  %99 = vmatprep.subr.bf16.mxu0 0
  %100 = vmatpush1.bf16.msra.mxu0 %v83
  %101 = vmatprep.subr.bf16.mxu0 0
  %102 = vmatpush1.bf16.msra.mxu0 %v84
  %103 = vmatprep.subr.bf16.mxu0 0
  %104 = vmatpush1.bf16.msra.mxu0 %v85
  %105 = vmatprep.subr.bf16.mxu0 0
  %106 = vmatpush1.bf16.msra.mxu0 %v86
  %107 = vmatprep.subr.bf16.mxu0 0
  %108 = vmatpush1.bf16.msra.mxu0 %v87
  %109 = vmatprep.subr.bf16.mxu0 0
  %110 = vmatpush1.bf16.msra.mxu0 %v88
  %111 = vmatprep.subr.bf16.mxu0 0
  %112 = vmatpush1.bf16.msra.mxu0 %v89
  %113 = vmatprep.subr.bf16.mxu0 0
  %114 = vmatpush1.bf16.msra.mxu0 %v90
  %115 = vmatprep.subr.bf16.mxu0 0
  %116 = vmatpush1.bf16.msra.mxu0 0
  %117 = vmatprep.subr.bf16.mxu0 0
  %118 = vmatpush1.bf16.msra.mxu0 0
  %119 = vmatprep.subr.bf16.mxu0 0
  %120 = vmatpush1.bf16.msra.mxu0 0
  %121 = vmatprep.subr.bf16.mxu0 0
  %122 = vmatpush1.bf16.msra.mxu0 0
  %123 = vmatprep.subr.bf16.mxu0 0
  %124 = vmatpush1.bf16.msra.mxu0 0
  %125 = vmatprep.subr.bf16.mxu0 0
  %126 = vmatpush1.bf16.msra.mxu0 0
  %127 = vmatprep.subr.bf16.mxu0 0
  %128 = vmatpush1.bf16.msra.mxu0 0
  %129 = vmatprep.subr.bf16.mxu0 0
  %130 = vmatpush1.bf16.msra.mxu0 0
  %131 = vmatprep.mubr.bf16.mxu0 0
  %132 = vmatmul.mubr.bf16.gmra.mrb[0].mxu0 %v27
  %v133 = vpop.f32.mrb[0].mxu0
  %v134 = vadd.f32 %v49, %v133
  %v135 = vpop.f32.mrb[0].mxu0
  %v136 = vpop.f32.mrb[0].mxu0
  %v137 = vadd.f32 %v49, %v136
  %v138 = vpop.f32.mrb[0].mxu0
  %139 = vdwg.mxu0
  %v140 = vtanh.pop %v134
  %v141 = vtanh.pop %v137
  %v142 = vpack.c.bf16 %v141, %v140
  %v143 = vld [vmem:[%s3] sm:$0xf]
  %v144 = vld [vmem:[%s3 + $0x4] sm:$0xf]
  %v145 = vld [vmem:[%s3 + $0x8] sm:$0xf]
  %v146 = vld [vmem:[%s3 + $0xc] sm:$0xf]
  %v147 = vld [vmem:[%s3 + $0x10] sm:$0xf]
  %v148 = vld [vmem:[%s3 + $0x14] sm:$0xf]
  %v149 = vld [vmem:[%s3 + $0x18] sm:$0xf]
  %v150 = vld [vmem:[%s3 + $0x1c] sm:$0xf]
  %v151 = vld [vmem:[%s3 + $0x20] sm:$0xf]
  %v152 = vld [vmem:[%s3 + $0x24] sm:$0xf]
  %v153 = vld [vmem:[%s3 + $0x28] sm:$0xf]
  %v154 = vld [vmem:[%s3 + $0x2c] sm:$0xf]
  %v155 = vld [vmem:[%s3 + $0x30] sm:$0xf]
  %v156 = vld [vmem:[%s3 + $0x34] sm:$0xf]
  %v157 = vld [vmem:[%s3 + $0x38] sm:$0xf]
  %v158 = vld [vmem:[%s3 + $0x3c] sm:$0xf]
  %v159 = vld [vmem:[%s4] sm:$0x1]
  %v161 = vlaneseq
  %v162 = vshrl.u32 %v161, 7
  %v163 = vsub.s32 0, %v162
  %v164 = vrot.slane %v159, %v163
  %v182 = vunpack.c.l.b16 %v143
  %v183 = vunpack.c.l.b16 %v144
  %v184 = vunpack.c.l.b16 %v145
  %v185 = vunpack.c.l.b16 %v146
  %v186 = vunpack.c.l.b16 %v147
  %v187 = vunpack.c.l.b16 %v148
  %v188 = vunpack.c.l.b16 %v149
  %v189 = vunpack.c.l.b16 %v150
  %v190 = vunpack.c.l.b16 %v151
  %v191 = vunpack.c.l.b16 %v152
  %v192 = vunpack.c.l.b16 %v153
  %v193 = vunpack.c.l.b16 %v154
  %v194 = vunpack.c.l.b16 %v155
  %v195 = vunpack.c.l.b16 %v156
  %v196 = vunpack.c.l.b16 %v157
  %v197 = vunpack.c.l.b16 %v158
  %v198 = vpack.c.b16 %v183, %v182
  %v199 = vpack.c.b16 %v185, %v184
  %v200 = vpack.c.b16 %v187, %v186
  %v201 = vpack.c.b16 %v189, %v188
  %v202 = vpack.c.b16 %v191, %v190
  %v203 = vpack.c.b16 %v193, %v192
  %v204 = vpack.c.b16 %v195, %v194
  %v205 = vpack.c.b16 %v197, %v196
  %214 = vmatprep.subr.bf16.mxu0 0
  %215 = vmatpush1.bf16.msra.mxu0 %v198
  %216 = vmatprep.subr.bf16.mxu0 0
  %217 = vmatpush1.bf16.msra.mxu0 %v199
  %218 = vmatprep.subr.bf16.mxu0 0
  %219 = vmatpush1.bf16.msra.mxu0 %v200
  %220 = vmatprep.subr.bf16.mxu0 0
  %221 = vmatpush1.bf16.msra.mxu0 %v201
  %222 = vmatprep.subr.bf16.mxu0 0
  %223 = vmatpush1.bf16.msra.mxu0 %v202
  %224 = vmatprep.subr.bf16.mxu0 0
  %225 = vmatpush1.bf16.msra.mxu0 %v203
  %226 = vmatprep.subr.bf16.mxu0 0
  %227 = vmatpush1.bf16.msra.mxu0 %v204
  %228 = vmatprep.subr.bf16.mxu0 0
  %229 = vmatpush1.bf16.msra.mxu0 %v205
  %230 = vmatprep.subr.bf16.mxu0 0
  %231 = vmatpush1.bf16.msra.mxu0 0
  %232 = vmatprep.subr.bf16.mxu0 0
  %233 = vmatpush1.bf16.msra.mxu0 0
  %234 = vmatprep.subr.bf16.mxu0 0
  %235 = vmatpush1.bf16.msra.mxu0 0
  %236 = vmatprep.subr.bf16.mxu0 0
  %237 = vmatpush1.bf16.msra.mxu0 0
  %238 = vmatprep.subr.bf16.mxu0 0
  %239 = vmatpush1.bf16.msra.mxu0 0
  %240 = vmatprep.subr.bf16.mxu0 0
  %241 = vmatpush1.bf16.msra.mxu0 0
  %242 = vmatprep.subr.bf16.mxu0 0
  %243 = vmatpush1.bf16.msra.mxu0 0
  %244 = vmatprep.subr.bf16.mxu0 0
  %245 = vmatpush1.bf16.msra.mxu0 0
  %246 = vmatprep.mubr.bf16.mxu0 0
  %247 = vmatmul.mubr.bf16.gmra.mrb[0].mxu0 %v142
  %v248 = vpop.f32.mrb[0].mxu0
  %v249 = vadd.f32 %v164, %v248
  %v250 = vpop.f32.mrb[0].mxu0
  %v251 = vpop.f32.mrb[0].mxu0
  %v252 = vadd.f32 %v164, %v251
  %v253 = vpop.f32.mrb[0].mxu0
  %254 = vdwg.mxu0
  %vm255 = vcmask 31744
  %256 = vst.msk [vmem:[%s5] sm:$0xff] %vm255, %v249
  %257 = vst.msk [vmem:[%s5 + $0x8] sm:$0xff] %vm255, %v252
  // Predicated region
  $region22: #{prediction_head_forward.1} parent=0 // pred_check
    _
  $region23: #{prediction_head_forward.1} parent=0 // pred_check_branch
    %259 = sbr.rel (0) target = $region25
  $region24: #{prediction_head_forward.1} parent=0 // pred_region
    _
  $region25: #{prediction_head_forward.1} parent=0 // pred_fallthru
    _
  // Predicated region
  $region26: #{prediction_head_forward.1} parent=0 // pred_check
    _
  $region27: #{prediction_head_forward.1} parent=0 // pred_check_branch
    %261 = sbr.rel (0) target = $region29
  $region28: #{prediction_head_forward.1} parent=0 // pred_region
    _
  $region29: #{prediction_head_forward.1} parent=0 // pred_fallthru
    _

</llo_original>
